<compile_context>
chip_gen: v5e
topology: v5e:2x2
jax: 0.10.0
libtpu: 0.0.40
codegen_flags: <defaults>
</compile_context>

<pallas_src>
import math

import jax
import jax.numpy as jnp
from jax import lax
from jax.experimental import pallas as pl
from jax.experimental.pallas import tpu as pltpu


def rnnec_kernel(inp_ref, noise_ref, bias_ref, x0_ref, u0_ref,
                 w_in_t_ref, w_rec_t_ref, w_out_t_ref,
                 x_out_ref, u_out_ref, y_out_ref,
                 pre_s, x_acc, u_acc):
    """Whole-sequence RNNEC forward in one kernel invocation.

    inp_ref   : (B, T, I)  batch-major input (PyTorch layout)
    noise_ref : (T, H)     pre-drawn standard normals (torch.randn(hidden)/step)
    bias_ref  : (1, H)
    x0/u0     : (B, H)     initial state
    w_in_t    : (I, H), w_rec_t : (H, H), w_out_t : (H, O)  (pre-transposed)
    x_out/u_out : (B, T, H), y_out : (B, T, O)
    pre_s/x_acc/u_acc : (T, B, H) VMEM scratch (time-major history)
    """
    B, T, _ = inp_ref.shape

    w_in_t = w_in_t_ref[...]
    w_rec_t = w_rec_t_ref[...]
    # bias + 0.01 * noise for every step, computed once (no per-step DMA/adds).
    bn = bias_ref[...] + 0.01 * noise_ref[...]           # (T, H)

    # --- 1) Input projection hoisted out of the recurrence -------------------
    # One (T, I) @ (I, H) matmul per batch row instead of T tiny per-step dots.
    for b in range(B):                                   # B is tiny & static
        pre_s[:, b, :] = (
            jnp.dot(inp_ref[b], w_in_t, preferred_element_type=jnp.float32) + bn)

    # --- 2) Serial recurrence, fully unrolled inside the kernel --------------
    def step(t, carry):
        x, u = carry
        delta = pre_s[t] + jnp.dot(u, w_rec_t,
                                   preferred_element_type=jnp.float32)
        x_new = 0.9 * x + 0.1 * delta
        u_new = jnp.tanh(x_new)
        x_acc[t] = x_new
        u_acc[t] = u_new
        return (x_new, u_new)

    lax.fori_loop(0, T, step, (x0_ref[...], u0_ref[...]), unroll=True)

    # --- 3) Output projection hoisted out of the loop + bulk writeback -------
    w_out_t = w_out_t_ref[...]
    for b in range(B):
        xb = x_acc[:, b, :]                              # (T, H)
        ub = u_acc[:, b, :]                              # (T, H)
        x_out_ref[b] = xb                                # batch-major bulk store
        u_out_ref[b] = ub
        y_out_ref[b] = jnp.dot(ub, w_out_t, preferred_element_type=jnp.float32)


def rnnec_forward(inp_bt, x0, u0, w_in, w_rec, w_out, bias, noise):
    """inp_bt: (B, T, I); x0,u0: (B, H); weights as in the PyTorch module;
    noise: (T, H) pre-drawn standard normals (the 0.01*randn(hidden) term).
    Returns (x, u, y) in PyTorch (B, T, feature) layout."""
    B, T, I = inp_bt.shape
    H = w_rec.shape[0]
    O = w_out.shape[0]

    inp = inp_bt.astype(jnp.float32)                     # (B, T, I), batch-major
    noise2 = noise.astype(jnp.float32)                   # (T, H)
    bias2 = bias.reshape(1, H).astype(jnp.float32)       # (1, H)
    w_in_t = jnp.transpose(w_in).astype(jnp.float32)     # (I, H)
    w_rec_t = jnp.transpose(w_rec).astype(jnp.float32)   # (H, H)
    w_out_t = jnp.transpose(w_out).astype(jnp.float32)   # (H, O)

    out_shapes = (
        jax.ShapeDtypeStruct((B, T, H), jnp.float32),    # x
        jax.ShapeDtypeStruct((B, T, H), jnp.float32),    # u
        jax.ShapeDtypeStruct((B, T, O), jnp.float32),    # y
    )

    x_out, u_out, y_out = pl.pallas_call(
        rnnec_kernel,
        out_shape=out_shapes,
        grid=(1,),
        in_specs=[
            pl.BlockSpec((B, T, I), lambda i: (0, 0, 0)),   # input (full array)
            pl.BlockSpec((T, H), lambda i: (0, 0)),         # noise table
            pl.BlockSpec((1, H), lambda i: (0, 0)),         # bias
            pl.BlockSpec((B, H), lambda i: (0, 0)),         # x0
            pl.BlockSpec((B, H), lambda i: (0, 0)),         # u0
            pl.BlockSpec((I, H), lambda i: (0, 0)),         # W_in^T
            pl.BlockSpec((H, H), lambda i: (0, 0)),         # W_rec^T
            pl.BlockSpec((H, O), lambda i: (0, 0)),         # W_out^T
        ],
        out_specs=(
            pl.BlockSpec((B, T, H), lambda i: (0, 0, 0)),
            pl.BlockSpec((B, T, H), lambda i: (0, 0, 0)),
            pl.BlockSpec((B, T, O), lambda i: (0, 0, 0)),
        ),
        scratch_shapes=[
            pltpu.VMEM((T, B, H), jnp.float32),   # pre-projection + bias + noise
            pltpu.VMEM((T, B, H), jnp.float32),   # x history (time-major)
            pltpu.VMEM((T, B, H), jnp.float32),   # u history (time-major)
        ],
        compiler_params=pltpu.CompilerParams(
            dimension_semantics=("arbitrary",)),  # single sequential step
    )(inp, noise2, bias2, x0.astype(jnp.float32), u0.astype(jnp.float32),
      w_in_t, w_rec_t, w_out_t)

    return x_out, u_out, y_out


def _reference(inp_bt, x0, u0, w_in, w_rec, w_out, bias, noise):
    """Pure-JAX reference mirroring the PyTorch loop."""
    def step(carry, args):
        x, u = carry
        i_t, n_t = args
        delta = (i_t @ w_in.T + bias) + (u @ w_rec.T) + 0.01 * n_t
        x = 0.9 * x + 0.1 * delta
        u = jnp.tanh(x)
        y = u @ w_out.T
        return (x, u), (x, u, y)

    inp_tb = jnp.transpose(inp_bt, (1, 0, 2))
    (_, _), (xs, us, ys) = jax.lax.scan(step, (x0, u0), (inp_tb, noise))
    return (jnp.transpose(xs, (1, 0, 2)),
            jnp.transpose(us, (1, 0, 2)),
            jnp.transpose(ys, (1, 0, 2)))


if __name__ == "__main__":
    B, T, I, H, O = 2, 8, 4, 32, 2

    key = jax.random.PRNGKey(0)
    k_in, k_rec, k_out, k_bias, k_x, k_u, k_inp, k_noise = jax.random.split(key, 8)

    # Deterministic parameter init (shapes from RNNGridCell.__init__ / reset_parameters):
    stdv_in = 1.0 / math.sqrt(2.0)
    w_in = jax.random.normal(k_in, (H, I), jnp.float32) + stdv_in      # normal_(mean=stdv_in, std=1)
    w_rec = jnp.linalg.qr(jax.random.normal(k_rec, (H, H), jnp.float32))[0]  # orthogonal init
    w_out = jax.random.normal(k_out, (O, H), jnp.float32) * (1.0 / math.sqrt(H))
    bias = jax.random.normal(k_bias, (H,), jnp.float32) * 0.1

    x0 = jax.random.normal(k_x, (B, H), jnp.float32) * 0.1
    u0 = jnp.tanh(x0)
    inp = jax.random.normal(k_inp, (B, T, I), jnp.float32)
    # The 0.01 * torch.randn(hidden) per-step noise, pre-drawn deterministically.
    noise = jax.random.normal(k_noise, (T, H), jnp.float32)

    out_x, out_u, out_y = rnnec_forward(inp, x0, u0, w_in, w_rec, w_out, bias, noise)
    jax.block_until_ready((out_x, out_u, out_y))

    ref_x, ref_u, ref_y = _reference(inp, x0, u0, w_in, w_rec, w_out, bias, noise)
    assert out_x.shape == (B, T, H) and out_u.shape == (B, T, H) and out_y.shape == (B, T, O)
    assert jnp.allclose(out_x, ref_x, atol=2e-3, rtol=2e-3)
    assert jnp.allclose(out_u, ref_u, atol=2e-3, rtol=2e-3)
    assert jnp.allclose(out_y, ref_y, atol=2e-3, rtol=2e-3)

    print("KERNEL_OK")
</pallas_src>

<mosaic_0001>
module attributes {stable_mosaic.version = 11 : i64} {
  func.func @rnnec_kernel(%arg0: i32, %arg1: memref<2x8x4xf32, #tpu.memory_space<vmem>>, %arg2: memref<8x32xf32, #tpu.memory_space<vmem>>, %arg3: memref<1x32xf32, #tpu.memory_space<vmem>>, %arg4: memref<2x32xf32, #tpu.memory_space<vmem>>, %arg5: memref<2x32xf32, #tpu.memory_space<vmem>>, %arg6: memref<4x32xf32, #tpu.memory_space<vmem>>, %arg7: memref<32x32xf32, #tpu.memory_space<vmem>>, %arg8: memref<32x2xf32, #tpu.memory_space<vmem>>, %arg9: memref<2x8x32xf32, #tpu.memory_space<vmem>>, %arg10: memref<2x8x32xf32, #tpu.memory_space<vmem>>, %arg11: memref<2x8x2xf32, #tpu.memory_space<vmem>>, %arg12: memref<8x2x32xf32, #tpu.memory_space<vmem>>, %arg13: memref<8x2x32xf32, #tpu.memory_space<vmem>>, %arg14: memref<8x2x32xf32, #tpu.memory_space<vmem>>) attributes {dimension_semantics = [#tpu.dimension_semantics<arbitrary>], iteration_bounds = array<i64: 1>, scalar_prefetch = 0 : i64, scratch_operands = 3 : i64, tpu.core_type = #tpu.core_type<tc>, window_params = [{pipeline_mode = #tpu.pipeline_mode<synchronous>, transform_indices = @transform_0, window_bounds = array<i64: 2, 8, 4>}, {pipeline_mode = #tpu.pipeline_mode<synchronous>, transform_indices = @transform_1, window_bounds = array<i64: 8, 32>}, {pipeline_mode = #tpu.pipeline_mode<synchronous>, transform_indices = @transform_2, window_bounds = array<i64: 1, 32>}, {pipeline_mode = #tpu.pipeline_mode<synchronous>, transform_indices = @transform_3, window_bounds = array<i64: 2, 32>}, {pipeline_mode = #tpu.pipeline_mode<synchronous>, transform_indices = @transform_4, window_bounds = array<i64: 2, 32>}, {pipeline_mode = #tpu.pipeline_mode<synchronous>, transform_indices = @transform_5, window_bounds = array<i64: 4, 32>}, {pipeline_mode = #tpu.pipeline_mode<synchronous>, transform_indices = @transform_6, window_bounds = array<i64: 32, 32>}, {pipeline_mode = #tpu.pipeline_mode<synchronous>, transform_indices = @transform_7, window_bounds = array<i64: 32, 2>}, {pipeline_mode = #tpu.pipeline_mode<synchronous>, transform_indices = @transform_8, window_bounds = array<i64: 2, 8, 32>}, {pipeline_mode = #tpu.pipeline_mode<synchronous>, transform_indices = @transform_9, window_bounds = array<i64: 2, 8, 32>}, {pipeline_mode = #tpu.pipeline_mode<synchronous>, transform_indices = @transform_10, window_bounds = array<i64: 2, 8, 2>}]} {
    %c0 = arith.constant 0 : index
    %c0_0 = arith.constant 0 : index
    %0 = vector.load %arg6[%c0, %c0_0] : memref<4x32xf32, #tpu.memory_space<vmem>>, vector<4x32xf32>
    %c0_1 = arith.constant 0 : index
    %c0_2 = arith.constant 0 : index
    %1 = vector.load %arg7[%c0_1, %c0_2] : memref<32x32xf32, #tpu.memory_space<vmem>>, vector<32x32xf32>
    %c0_3 = arith.constant 0 : index
    %c0_4 = arith.constant 0 : index
    %2 = vector.load %arg3[%c0_3, %c0_4] : memref<1x32xf32, #tpu.memory_space<vmem>>, vector<1x32xf32>
    %c0_5 = arith.constant 0 : index
    %c0_6 = arith.constant 0 : index
    %3 = vector.load %arg2[%c0_5, %c0_6] : memref<8x32xf32, #tpu.memory_space<vmem>>, vector<8x32xf32>
    %cst = arith.constant 0.00999999977 : f32
    %4 = vector.broadcast %cst : f32 to vector<8x32xf32>
    %5 = arith.mulf %4, %3 : vector<8x32xf32>
    %6 = vector.broadcast %2 : vector<1x32xf32> to vector<8x32xf32>
    %7 = arith.addf %6, %5 : vector<8x32xf32>
    %c0_7 = arith.constant 0 : index
    %c0_8 = arith.constant 0 : index
    %c0_9 = arith.constant 0 : index
    %8 = vector.load %arg1[%c0_7, %c0_8, %c0_9] : memref<2x8x4xf32, #tpu.memory_space<vmem>>, vector<1x8x4xf32>
    %9 = vector.shape_cast %8 : vector<1x8x4xf32> to vector<8x4xf32>
    %cst_10 = arith.constant dense<0.000000e+00> : vector<8x32xf32>
    %10 = tpu.matmul %9, %0, %cst_10 {dimension_numbers = #tpu.dot_dimension_numbers<[1], [0], [0], [1], [0, 0, 1, 1], [], []>} : vector<8x4xf32>, vector<4x32xf32>, vector<8x32xf32> -> vector<8x32xf32>
    %11 = arith.addf %10, %7 : vector<8x32xf32>
    %c0_11 = arith.constant 0 : index
    %c0_12 = arith.constant 0 : index
    %c0_13 = arith.constant 0 : index
    %12 = vector.load %arg12[%c0_11, %c0_12, %c0_13] : memref<8x2x32xf32, #tpu.memory_space<vmem>>, vector<8x1x32xf32>
    %13 = vector.shape_cast %12 : vector<8x1x32xf32> to vector<8x32xf32>
    %14 = vector.shape_cast %11 : vector<8x32xf32> to vector<8x1x32xf32>
    tpu.vector_store %arg12[%c0_11, %c0_12, %c0_13], %14 {strides = array<i32>} : memref<8x2x32xf32, #tpu.memory_space<vmem>>, vector<8x1x32xf32>,
    %c1 = arith.constant 1 : index
    %c0_14 = arith.constant 0 : index
    %c0_15 = arith.constant 0 : index
    %15 = vector.load %arg1[%c1, %c0_14, %c0_15] : memref<2x8x4xf32, #tpu.memory_space<vmem>>, vector<1x8x4xf32>
    %16 = vector.shape_cast %15 : vector<1x8x4xf32> to vector<8x4xf32>
    %cst_16 = arith.constant dense<0.000000e+00> : vector<8x32xf32>
    %17 = tpu.matmul %16, %0, %cst_16 {dimension_numbers = #tpu.dot_dimension_numbers<[1], [0], [0], [1], [0, 0, 1, 1], [], []>} : vector<8x4xf32>, vector<4x32xf32>, vector<8x32xf32> -> vector<8x32xf32>
    %18 = arith.addf %17, %7 : vector<8x32xf32>
    %c0_17 = arith.constant 0 : index
    %c1_18 = arith.constant 1 : index
    %c0_19 = arith.constant 0 : index
    %19 = vector.load %arg12[%c0_17, %c1_18, %c0_19] : memref<8x2x32xf32, #tpu.memory_space<vmem>>, vector<8x1x32xf32>
    %20 = vector.shape_cast %19 : vector<8x1x32xf32> to vector<8x32xf32>
    %21 = vector.shape_cast %18 : vector<8x32xf32> to vector<8x1x32xf32>
    tpu.vector_store %arg12[%c0_17, %c1_18, %c0_19], %21 {strides = array<i32>} : memref<8x2x32xf32, #tpu.memory_space<vmem>>, vector<8x1x32xf32>,
    %c0_20 = arith.constant 0 : index
    %c0_21 = arith.constant 0 : index
    %22 = vector.load %arg4[%c0_20, %c0_21] : memref<2x32xf32, #tpu.memory_space<vmem>>, vector<2x32xf32>
    %c0_22 = arith.constant 0 : index
    %c0_23 = arith.constant 0 : index
    %23 = vector.load %arg5[%c0_22, %c0_23] : memref<2x32xf32, #tpu.memory_space<vmem>>, vector<2x32xf32>
    %c0_i32 = arith.constant 0 : i32
    %24 = arith.index_cast %c0_i32 : i32 to index
    %c0_24 = arith.constant 0 : index
    %c0_25 = arith.constant 0 : index
    %25 = vector.load %arg12[%24, %c0_24, %c0_25] : memref<8x2x32xf32, #tpu.memory_space<vmem>>, vector<1x2x32xf32>
    %26 = vector.shape_cast %25 : vector<1x2x32xf32> to vector<2x32xf32>
    %cst_26 = arith.constant dense<0.000000e+00> : vector<2x32xf32>
    %27 = tpu.matmul %23, %1, %cst_26 {dimension_numbers = #tpu.dot_dimension_numbers<[1], [0], [0], [1], [0, 0, 1, 1], [], []>} : vector<2x32xf32>, vector<32x32xf32>, vector<2x32xf32> -> vector<2x32xf32>
    %28 = arith.addf %26, %27 : vector<2x32xf32>
    %cst_27 = arith.constant 0.899999976 : f32
    %29 = vector.broadcast %cst_27 : f32 to vector<2x32xf32>
    %30 = arith.mulf %29, %22 : vector<2x32xf32>
    %cst_28 = arith.constant 1.000000e-01 : f32
    %31 = vector.broadcast %cst_28 : f32 to vector<2x32xf32>
    %32 = arith.mulf %31, %28 : vector<2x32xf32>
    %33 = arith.addf %30, %32 : vector<2x32xf32>
    %34 = math.tanh %33 : vector<2x32xf32>
    %35 = arith.index_cast %c0_i32 : i32 to index
    %c0_29 = arith.constant 0 : index
    %c0_30 = arith.constant 0 : index
    %36 = vector.load %arg13[%35, %c0_29, %c0_30] : memref<8x2x32xf32, #tpu.memory_space<vmem>>, vector<1x2x32xf32>
    %37 = vector.shape_cast %36 : vector<1x2x32xf32> to vector<2x32xf32>
    %38 = vector.shape_cast %33 : vector<2x32xf32> to vector<1x2x32xf32>
    tpu.vector_store %arg13[%35, %c0_29, %c0_30], %38 {strides = array<i32>} : memref<8x2x32xf32, #tpu.memory_space<vmem>>, vector<1x2x32xf32>,
    %39 = arith.index_cast %c0_i32 : i32 to index
    %c0_31 = arith.constant 0 : index
    %c0_32 = arith.constant 0 : index
    %40 = vector.load %arg14[%39, %c0_31, %c0_32] : memref<8x2x32xf32, #tpu.memory_space<vmem>>, vector<1x2x32xf32>
    %41 = vector.shape_cast %40 : vector<1x2x32xf32> to vector<2x32xf32>
    %42 = vector.shape_cast %34 : vector<2x32xf32> to vector<1x2x32xf32>
    tpu.vector_store %arg14[%39, %c0_31, %c0_32], %42 {strides = array<i32>} : memref<8x2x32xf32, #tpu.memory_space<vmem>>, vector<1x2x32xf32>,
    %c1_i32 = arith.constant 1 : i32
    %43 = arith.index_cast %c1_i32 : i32 to index
    %c0_33 = arith.constant 0 : index
    %c0_34 = arith.constant 0 : index
    %44 = vector.load %arg12[%43, %c0_33, %c0_34] : memref<8x2x32xf32, #tpu.memory_space<vmem>>, vector<1x2x32xf32>
    %45 = vector.shape_cast %44 : vector<1x2x32xf32> to vector<2x32xf32>
    %cst_35 = arith.constant dense<0.000000e+00> : vector<2x32xf32>
    %46 = tpu.matmul %34, %1, %cst_35 {dimension_numbers = #tpu.dot_dimension_numbers<[1], [0], [0], [1], [0, 0, 1, 1], [], []>} : vector<2x32xf32>, vector<32x32xf32>, vector<2x32xf32> -> vector<2x32xf32>
    %47 = arith.addf %45, %46 : vector<2x32xf32>
    %cst_36 = arith.constant 0.899999976 : f32
    %48 = vector.broadcast %cst_36 : f32 to vector<2x32xf32>
    %49 = arith.mulf %48, %33 : vector<2x32xf32>
    %cst_37 = arith.constant 1.000000e-01 : f32
    %50 = vector.broadcast %cst_37 : f32 to vector<2x32xf32>
    %51 = arith.mulf %50, %47 : vector<2x32xf32>
    %52 = arith.addf %49, %51 : vector<2x32xf32>
    %53 = math.tanh %52 : vector<2x32xf32>
    %54 = arith.index_cast %c1_i32 : i32 to index
    %c0_38 = arith.constant 0 : index
    %c0_39 = arith.constant 0 : index
    %55 = vector.load %arg13[%54, %c0_38, %c0_39] : memref<8x2x32xf32, #tpu.memory_space<vmem>>, vector<1x2x32xf32>
    %56 = vector.shape_cast %55 : vector<1x2x32xf32> to vector<2x32xf32>
    %57 = vector.shape_cast %52 : vector<2x32xf32> to vector<1x2x32xf32>
    tpu.vector_store %arg13[%54, %c0_38, %c0_39], %57 {strides = array<i32>} : memref<8x2x32xf32, #tpu.memory_space<vmem>>, vector<1x2x32xf32>,
    %58 = arith.index_cast %c1_i32 : i32 to index
    %c0_40 = arith.constant 0 : index
    %c0_41 = arith.constant 0 : index
    %59 = vector.load %arg14[%58, %c0_40, %c0_41] : memref<8x2x32xf32, #tpu.memory_space<vmem>>, vector<1x2x32xf32>
    %60 = vector.shape_cast %59 : vector<1x2x32xf32> to vector<2x32xf32>
    %61 = vector.shape_cast %53 : vector<2x32xf32> to vector<1x2x32xf32>
    tpu.vector_store %arg14[%58, %c0_40, %c0_41], %61 {strides = array<i32>} : memref<8x2x32xf32, #tpu.memory_space<vmem>>, vector<1x2x32xf32>,
    %c2_i32 = arith.constant 2 : i32
    %62 = arith.index_cast %c2_i32 : i32 to index
    %c0_42 = arith.constant 0 : index
    %c0_43 = arith.constant 0 : index
    %63 = vector.load %arg12[%62, %c0_42, %c0_43] : memref<8x2x32xf32, #tpu.memory_space<vmem>>, vector<1x2x32xf32>
    %64 = vector.shape_cast %63 : vector<1x2x32xf32> to vector<2x32xf32>
    %cst_44 = arith.constant dense<0.000000e+00> : vector<2x32xf32>
    %65 = tpu.matmul %53, %1, %cst_44 {dimension_numbers = #tpu.dot_dimension_numbers<[1], [0], [0], [1], [0, 0, 1, 1], [], []>} : vector<2x32xf32>, vector<32x32xf32>, vector<2x32xf32> -> vector<2x32xf32>
    %66 = arith.addf %64, %65 : vector<2x32xf32>
    %cst_45 = arith.constant 0.899999976 : f32
    %67 = vector.broadcast %cst_45 : f32 to vector<2x32xf32>
    %68 = arith.mulf %67, %52 : vector<2x32xf32>
    %cst_46 = arith.constant 1.000000e-01 : f32
    %69 = vector.broadcast %cst_46 : f32 to vector<2x32xf32>
    %70 = arith.mulf %69, %66 : vector<2x32xf32>
    %71 = arith.addf %68, %70 : vector<2x32xf32>
    %72 = math.tanh %71 : vector<2x32xf32>
    %73 = arith.index_cast %c2_i32 : i32 to index
    %c0_47 = arith.constant 0 : index
    %c0_48 = arith.constant 0 : index
    %74 = vector.load %arg13[%73, %c0_47, %c0_48] : memref<8x2x32xf32, #tpu.memory_space<vmem>>, vector<1x2x32xf32>
    %75 = vector.shape_cast %74 : vector<1x2x32xf32> to vector<2x32xf32>
    %76 = vector.shape_cast %71 : vector<2x32xf32> to vector<1x2x32xf32>
    tpu.vector_store %arg13[%73, %c0_47, %c0_48], %76 {strides = array<i32>} : memref<8x2x32xf32, #tpu.memory_space<vmem>>, vector<1x2x32xf32>,
    %77 = arith.index_cast %c2_i32 : i32 to index
    %c0_49 = arith.constant 0 : index
    %c0_50 = arith.constant 0 : index
    %78 = vector.load %arg14[%77, %c0_49, %c0_50] : memref<8x2x32xf32, #tpu.memory_space<vmem>>, vector<1x2x32xf32>
    %79 = vector.shape_cast %78 : vector<1x2x32xf32> to vector<2x32xf32>
    %80 = vector.shape_cast %72 : vector<2x32xf32> to vector<1x2x32xf32>
    tpu.vector_store %arg14[%77, %c0_49, %c0_50], %80 {strides = array<i32>} : memref<8x2x32xf32, #tpu.memory_space<vmem>>, vector<1x2x32xf32>,
    %c3_i32 = arith.constant 3 : i32
    %81 = arith.index_cast %c3_i32 : i32 to index
    %c0_51 = arith.constant 0 : index
    %c0_52 = arith.constant 0 : index
    %82 = vector.load %arg12[%81, %c0_51, %c0_52] : memref<8x2x32xf32, #tpu.memory_space<vmem>>, vector<1x2x32xf32>
    %83 = vector.shape_cast %82 : vector<1x2x32xf32> to vector<2x32xf32>
    %cst_53 = arith.constant dense<0.000000e+00> : vector<2x32xf32>
    %84 = tpu.matmul %72, %1, %cst_53 {dimension_numbers = #tpu.dot_dimension_numbers<[1], [0], [0], [1], [0, 0, 1, 1], [], []>} : vector<2x32xf32>, vector<32x32xf32>, vector<2x32xf32> -> vector<2x32xf32>
    %85 = arith.addf %83, %84 : vector<2x32xf32>
    %cst_54 = arith.constant 0.899999976 : f32
    %86 = vector.broadcast %cst_54 : f32 to vector<2x32xf32>
    %87 = arith.mulf %86, %71 : vector<2x32xf32>
    %cst_55 = arith.constant 1.000000e-01 : f32
    %88 = vector.broadcast %cst_55 : f32 to vector<2x32xf32>
    %89 = arith.mulf %88, %85 : vector<2x32xf32>
    %90 = arith.addf %87, %89 : vector<2x32xf32>
    %91 = math.tanh %90 : vector<2x32xf32>
    %92 = arith.index_cast %c3_i32 : i32 to index
    %c0_56 = arith.constant 0 : index
    %c0_57 = arith.constant 0 : index
    %93 = vector.load %arg13[%92, %c0_56, %c0_57] : memref<8x2x32xf32, #tpu.memory_space<vmem>>, vector<1x2x32xf32>
    %94 = vector.shape_cast %93 : vector<1x2x32xf32> to vector<2x32xf32>
    %95 = vector.shape_cast %90 : vector<2x32xf32> to vector<1x2x32xf32>
    tpu.vector_store %arg13[%92, %c0_56, %c0_57], %95 {strides = array<i32>} : memref<8x2x32xf32, #tpu.memory_space<vmem>>, vector<1x2x32xf32>,
    %96 = arith.index_cast %c3_i32 : i32 to index
    %c0_58 = arith.constant 0 : index
    %c0_59 = arith.constant 0 : index
    %97 = vector.load %arg14[%96, %c0_58, %c0_59] : memref<8x2x32xf32, #tpu.memory_space<vmem>>, vector<1x2x32xf32>
    %98 = vector.shape_cast %97 : vector<1x2x32xf32> to vector<2x32xf32>
    %99 = vector.shape_cast %91 : vector<2x32xf32> to vector<1x2x32xf32>
    tpu.vector_store %arg14[%96, %c0_58, %c0_59], %99 {strides = array<i32>} : memref<8x2x32xf32, #tpu.memory_space<vmem>>, vector<1x2x32xf32>,
    %c4_i32 = arith.constant 4 : i32
    %100 = arith.index_cast %c4_i32 : i32 to index
    %c0_60 = arith.constant 0 : index
    %c0_61 = arith.constant 0 : index
    %101 = vector.load %arg12[%100, %c0_60, %c0_61] : memref<8x2x32xf32, #tpu.memory_space<vmem>>, vector<1x2x32xf32>
    %102 = vector.shape_cast %101 : vector<1x2x32xf32> to vector<2x32xf32>
    %cst_62 = arith.constant dense<0.000000e+00> : vector<2x32xf32>
    %103 = tpu.matmul %91, %1, %cst_62 {dimension_numbers = #tpu.dot_dimension_numbers<[1], [0], [0], [1], [0, 0, 1, 1], [], []>} : vector<2x32xf32>, vector<32x32xf32>, vector<2x32xf32> -> vector<2x32xf32>
    %104 = arith.addf %102, %103 : vector<2x32xf32>
    %cst_63 = arith.constant 0.899999976 : f32
    %105 = vector.broadcast %cst_63 : f32 to vector<2x32xf32>
    %106 = arith.mulf %105, %90 : vector<2x32xf32>
    %cst_64 = arith.constant 1.000000e-01 : f32
    %107 = vector.broadcast %cst_64 : f32 to vector<2x32xf32>
    %108 = arith.mulf %107, %104 : vector<2x32xf32>
    %109 = arith.addf %106, %108 : vector<2x32xf32>
    %110 = math.tanh %109 : vector<2x32xf32>
    %111 = arith.index_cast %c4_i32 : i32 to index
    %c0_65 = arith.constant 0 : index
    %c0_66 = arith.constant 0 : index
    %112 = vector.load %arg13[%111, %c0_65, %c0_66] : memref<8x2x32xf32, #tpu.memory_space<vmem>>, vector<1x2x32xf32>
    %113 = vector.shape_cast %112 : vector<1x2x32xf32> to vector<2x32xf32>
    %114 = vector.shape_cast %109 : vector<2x32xf32> to vector<1x2x32xf32>
    tpu.vector_store %arg13[%111, %c0_65, %c0_66], %114 {strides = array<i32>} : memref<8x2x32xf32, #tpu.memory_space<vmem>>, vector<1x2x32xf32>,
    %115 = arith.index_cast %c4_i32 : i32 to index
    %c0_67 = arith.constant 0 : index
    %c0_68 = arith.constant 0 : index
    %116 = vector.load %arg14[%115, %c0_67, %c0_68] : memref<8x2x32xf32, #tpu.memory_space<vmem>>, vector<1x2x32xf32>
    %117 = vector.shape_cast %116 : vector<1x2x32xf32> to vector<2x32xf32>
    %118 = vector.shape_cast %110 : vector<2x32xf32> to vector<1x2x32xf32>
    tpu.vector_store %arg14[%115, %c0_67, %c0_68], %118 {strides = array<i32>} : memref<8x2x32xf32, #tpu.memory_space<vmem>>, vector<1x2x32xf32>,
    %c5_i32 = arith.constant 5 : i32
    %119 = arith.index_cast %c5_i32 : i32 to index
    %c0_69 = arith.constant 0 : index
    %c0_70 = arith.constant 0 : index
    %120 = vector.load %arg12[%119, %c0_69, %c0_70] : memref<8x2x32xf32, #tpu.memory_space<vmem>>, vector<1x2x32xf32>
    %121 = vector.shape_cast %120 : vector<1x2x32xf32> to vector<2x32xf32>
    %cst_71 = arith.constant dense<0.000000e+00> : vector<2x32xf32>
    %122 = tpu.matmul %110, %1, %cst_71 {dimension_numbers = #tpu.dot_dimension_numbers<[1], [0], [0], [1], [0, 0, 1, 1], [], []>} : vector<2x32xf32>, vector<32x32xf32>, vector<2x32xf32> -> vector<2x32xf32>
    %123 = arith.addf %121, %122 : vector<2x32xf32>
    %cst_72 = arith.constant 0.899999976 : f32
    %124 = vector.broadcast %cst_72 : f32 to vector<2x32xf32>
    %125 = arith.mulf %124, %109 : vector<2x32xf32>
    %cst_73 = arith.constant 1.000000e-01 : f32
    %126 = vector.broadcast %cst_73 : f32 to vector<2x32xf32>
    %127 = arith.mulf %126, %123 : vector<2x32xf32>
    %128 = arith.addf %125, %127 : vector<2x32xf32>
    %129 = math.tanh %128 : vector<2x32xf32>
    %130 = arith.index_cast %c5_i32 : i32 to index
    %c0_74 = arith.constant 0 : index
    %c0_75 = arith.constant 0 : index
    %131 = vector.load %arg13[%130, %c0_74, %c0_75] : memref<8x2x32xf32, #tpu.memory_space<vmem>>, vector<1x2x32xf32>
    %132 = vector.shape_cast %131 : vector<1x2x32xf32> to vector<2x32xf32>
    %133 = vector.shape_cast %128 : vector<2x32xf32> to vector<1x2x32xf32>
    tpu.vector_store %arg13[%130, %c0_74, %c0_75], %133 {strides = array<i32>} : memref<8x2x32xf32, #tpu.memory_space<vmem>>, vector<1x2x32xf32>,
    %134 = arith.index_cast %c5_i32 : i32 to index
    %c0_76 = arith.constant 0 : index
    %c0_77 = arith.constant 0 : index
    %135 = vector.load %arg14[%134, %c0_76, %c0_77] : memref<8x2x32xf32, #tpu.memory_space<vmem>>, vector<1x2x32xf32>
    %136 = vector.shape_cast %135 : vector<1x2x32xf32> to vector<2x32xf32>
    %137 = vector.shape_cast %129 : vector<2x32xf32> to vector<1x2x32xf32>
    tpu.vector_store %arg14[%134, %c0_76, %c0_77], %137 {strides = array<i32>} : memref<8x2x32xf32, #tpu.memory_space<vmem>>, vector<1x2x32xf32>,
    %c6_i32 = arith.constant 6 : i32
    %138 = arith.index_cast %c6_i32 : i32 to index
    %c0_78 = arith.constant 0 : index
    %c0_79 = arith.constant 0 : index
    %139 = vector.load %arg12[%138, %c0_78, %c0_79] : memref<8x2x32xf32, #tpu.memory_space<vmem>>, vector<1x2x32xf32>
    %140 = vector.shape_cast %139 : vector<1x2x32xf32> to vector<2x32xf32>
    %cst_80 = arith.constant dense<0.000000e+00> : vector<2x32xf32>
    %141 = tpu.matmul %129, %1, %cst_80 {dimension_numbers = #tpu.dot_dimension_numbers<[1], [0], [0], [1], [0, 0, 1, 1], [], []>} : vector<2x32xf32>, vector<32x32xf32>, vector<2x32xf32> -> vector<2x32xf32>
    %142 = arith.addf %140, %141 : vector<2x32xf32>
    %cst_81 = arith.constant 0.899999976 : f32
    %143 = vector.broadcast %cst_81 : f32 to vector<2x32xf32>
    %144 = arith.mulf %143, %128 : vector<2x32xf32>
    %cst_82 = arith.constant 1.000000e-01 : f32
    %145 = vector.broadcast %cst_82 : f32 to vector<2x32xf32>
    %146 = arith.mulf %145, %142 : vector<2x32xf32>
    %147 = arith.addf %144, %146 : vector<2x32xf32>
    %148 = math.tanh %147 : vector<2x32xf32>
    %149 = arith.index_cast %c6_i32 : i32 to index
    %c0_83 = arith.constant 0 : index
    %c0_84 = arith.constant 0 : index
    %150 = vector.load %arg13[%149, %c0_83, %c0_84] : memref<8x2x32xf32, #tpu.memory_space<vmem>>, vector<1x2x32xf32>
    %151 = vector.shape_cast %150 : vector<1x2x32xf32> to vector<2x32xf32>
    %152 = vector.shape_cast %147 : vector<2x32xf32> to vector<1x2x32xf32>
    tpu.vector_store %arg13[%149, %c0_83, %c0_84], %152 {strides = array<i32>} : memref<8x2x32xf32, #tpu.memory_space<vmem>>, vector<1x2x32xf32>,
    %153 = arith.index_cast %c6_i32 : i32 to index
    %c0_85 = arith.constant 0 : index
    %c0_86 = arith.constant 0 : index
    %154 = vector.load %arg14[%153, %c0_85, %c0_86] : memref<8x2x32xf32, #tpu.memory_space<vmem>>, vector<1x2x32xf32>
    %155 = vector.shape_cast %154 : vector<1x2x32xf32> to vector<2x32xf32>
    %156 = vector.shape_cast %148 : vector<2x32xf32> to vector<1x2x32xf32>
    tpu.vector_store %arg14[%153, %c0_85, %c0_86], %156 {strides = array<i32>} : memref<8x2x32xf32, #tpu.memory_space<vmem>>, vector<1x2x32xf32>,
    %c7_i32 = arith.constant 7 : i32
    %157 = arith.index_cast %c7_i32 : i32 to index
    %c0_87 = arith.constant 0 : index
    %c0_88 = arith.constant 0 : index
    %158 = vector.load %arg12[%157, %c0_87, %c0_88] : memref<8x2x32xf32, #tpu.memory_space<vmem>>, vector<1x2x32xf32>
    %159 = vector.shape_cast %158 : vector<1x2x32xf32> to vector<2x32xf32>
    %cst_89 = arith.constant dense<0.000000e+00> : vector<2x32xf32>
    %160 = tpu.matmul %148, %1, %cst_89 {dimension_numbers = #tpu.dot_dimension_numbers<[1], [0], [0], [1], [0, 0, 1, 1], [], []>} : vector<2x32xf32>, vector<32x32xf32>, vector<2x32xf32> -> vector<2x32xf32>
    %161 = arith.addf %159, %160 : vector<2x32xf32>
    %cst_90 = arith.constant 0.899999976 : f32
    %162 = vector.broadcast %cst_90 : f32 to vector<2x32xf32>
    %163 = arith.mulf %162, %147 : vector<2x32xf32>
    %cst_91 = arith.constant 1.000000e-01 : f32
    %164 = vector.broadcast %cst_91 : f32 to vector<2x32xf32>
    %165 = arith.mulf %164, %161 : vector<2x32xf32>
    %166 = arith.addf %163, %165 : vector<2x32xf32>
    %167 = math.tanh %166 : vector<2x32xf32>
    %168 = arith.index_cast %c7_i32 : i32 to index
    %c0_92 = arith.constant 0 : index
    %c0_93 = arith.constant 0 : index
    %169 = vector.load %arg13[%168, %c0_92, %c0_93] : memref<8x2x32xf32, #tpu.memory_space<vmem>>, vector<1x2x32xf32>
    %170 = vector.shape_cast %169 : vector<1x2x32xf32> to vector<2x32xf32>
    %171 = vector.shape_cast %166 : vector<2x32xf32> to vector<1x2x32xf32>
    tpu.vector_store %arg13[%168, %c0_92, %c0_93], %171 {strides = array<i32>} : memref<8x2x32xf32, #tpu.memory_space<vmem>>, vector<1x2x32xf32>,
    %172 = arith.index_cast %c7_i32 : i32 to index
    %c0_94 = arith.constant 0 : index
    %c0_95 = arith.constant 0 : index
    %173 = vector.load %arg14[%172, %c0_94, %c0_95] : memref<8x2x32xf32, #tpu.memory_space<vmem>>, vector<1x2x32xf32>
    %174 = vector.shape_cast %173 : vector<1x2x32xf32> to vector<2x32xf32>
    %175 = vector.shape_cast %167 : vector<2x32xf32> to vector<1x2x32xf32>
    tpu.vector_store %arg14[%172, %c0_94, %c0_95], %175 {strides = array<i32>} : memref<8x2x32xf32, #tpu.memory_space<vmem>>, vector<1x2x32xf32>,
    %c8_i32 = arith.constant 8 : i32
    %c0_96 = arith.constant 0 : index
    %c0_97 = arith.constant 0 : index
    %176 = vector.load %arg8[%c0_96, %c0_97] : memref<32x2xf32, #tpu.memory_space<vmem>>, vector<32x2xf32>
    %c0_98 = arith.constant 0 : index
    %c0_99 = arith.constant 0 : index
    %c0_100 = arith.constant 0 : index
    %177 = vector.load %arg13[%c0_98, %c0_99, %c0_100] : memref<8x2x32xf32, #tpu.memory_space<vmem>>, vector<8x1x32xf32>
    %178 = vector.shape_cast %177 : vector<8x1x32xf32> to vector<8x32xf32>
    %c0_101 = arith.constant 0 : index
    %c0_102 = arith.constant 0 : index
    %c0_103 = arith.constant 0 : index
    %179 = vector.load %arg14[%c0_101, %c0_102, %c0_103] : memref<8x2x32xf32, #tpu.memory_space<vmem>>, vector<8x1x32xf32>
    %180 = vector.shape_cast %179 : vector<8x1x32xf32> to vector<8x32xf32>
    %c0_104 = arith.constant 0 : index
    %c0_105 = arith.constant 0 : index
    %c0_106 = arith.constant 0 : index
    %181 = vector.load %arg9[%c0_104, %c0_105, %c0_106] : memref<2x8x32xf32, #tpu.memory_space<vmem>>, vector<1x8x32xf32>
    %182 = vector.shape_cast %181 : vector<1x8x32xf32> to vector<8x32xf32>
    %183 = vector.shape_cast %178 : vector<8x32xf32> to vector<1x8x32xf32>
    tpu.vector_store %arg9[%c0_104, %c0_105, %c0_106], %183 {strides = array<i32>} : memref<2x8x32xf32, #tpu.memory_space<vmem>>, vector<1x8x32xf32>,
    %c0_107 = arith.constant 0 : index
    %c0_108 = arith.constant 0 : index
    %c0_109 = arith.constant 0 : index
    %184 = vector.load %arg10[%c0_107, %c0_108, %c0_109] : memref<2x8x32xf32, #tpu.memory_space<vmem>>, vector<1x8x32xf32>
    %185 = vector.shape_cast %184 : vector<1x8x32xf32> to vector<8x32xf32>
    %186 = vector.shape_cast %180 : vector<8x32xf32> to vector<1x8x32xf32>
    tpu.vector_store %arg10[%c0_107, %c0_108, %c0_109], %186 {strides = array<i32>} : memref<2x8x32xf32, #tpu.memory_space<vmem>>, vector<1x8x32xf32>,
    %cst_110 = arith.constant dense<0.000000e+00> : vector<8x2xf32>
    %187 = tpu.matmul %180, %176, %cst_110 {dimension_numbers = #tpu.dot_dimension_numbers<[1], [0], [0], [1], [0, 0, 1, 1], [], []>} : vector<8x32xf32>, vector<32x2xf32>, vector<8x2xf32> -> vector<8x2xf32>
    %c0_111 = arith.constant 0 : index
    %c0_112 = arith.constant 0 : index
    %c0_113 = arith.constant 0 : index
    %188 = vector.load %arg11[%c0_111, %c0_112, %c0_113] : memref<2x8x2xf32, #tpu.memory_space<vmem>>, vector<1x8x2xf32>
    %189 = vector.shape_cast %188 : vector<1x8x2xf32> to vector<8x2xf32>
    %190 = vector.shape_cast %187 : vector<8x2xf32> to vector<1x8x2xf32>
    tpu.vector_store %arg11[%c0_111, %c0_112, %c0_113], %190 {strides = array<i32>} : memref<2x8x2xf32, #tpu.memory_space<vmem>>, vector<1x8x2xf32>,
    %c0_114 = arith.constant 0 : index
    %c1_115 = arith.constant 1 : index
    %c0_116 = arith.constant 0 : index
    %191 = vector.load %arg13[%c0_114, %c1_115, %c0_116] : memref<8x2x32xf32, #tpu.memory_space<vmem>>, vector<8x1x32xf32>
    %192 = vector.shape_cast %191 : vector<8x1x32xf32> to vector<8x32xf32>
    %c0_117 = arith.constant 0 : index
    %c1_118 = arith.constant 1 : index
    %c0_119 = arith.constant 0 : index
    %193 = vector.load %arg14[%c0_117, %c1_118, %c0_119] : memref<8x2x32xf32, #tpu.memory_space<vmem>>, vector<8x1x32xf32>
    %194 = vector.shape_cast %193 : vector<8x1x32xf32> to vector<8x32xf32>
    %c1_120 = arith.constant 1 : index
    %c0_121 = arith.constant 0 : index
    %c0_122 = arith.constant 0 : index
    %195 = vector.load %arg9[%c1_120, %c0_121, %c0_122] : memref<2x8x32xf32, #tpu.memory_space<vmem>>, vector<1x8x32xf32>
    %196 = vector.shape_cast %195 : vector<1x8x32xf32> to vector<8x32xf32>
    %197 = vector.shape_cast %192 : vector<8x32xf32> to vector<1x8x32xf32>
    tpu.vector_store %arg9[%c1_120, %c0_121, %c0_122], %197 {strides = array<i32>} : memref<2x8x32xf32, #tpu.memory_space<vmem>>, vector<1x8x32xf32>,
    %c1_123 = arith.constant 1 : index
    %c0_124 = arith.constant 0 : index
    %c0_125 = arith.constant 0 : index
    %198 = vector.load %arg10[%c1_123, %c0_124, %c0_125] : memref<2x8x32xf32, #tpu.memory_space<vmem>>, vector<1x8x32xf32>
    %199 = vector.shape_cast %198 : vector<1x8x32xf32> to vector<8x32xf32>
    %200 = vector.shape_cast %194 : vector<8x32xf32> to vector<1x8x32xf32>
    tpu.vector_store %arg10[%c1_123, %c0_124, %c0_125], %200 {strides = array<i32>} : memref<2x8x32xf32, #tpu.memory_space<vmem>>, vector<1x8x32xf32>,
    %cst_126 = arith.constant dense<0.000000e+00> : vector<8x2xf32>
    %201 = tpu.matmul %194, %176, %cst_126 {dimension_numbers = #tpu.dot_dimension_numbers<[1], [0], [0], [1], [0, 0, 1, 1], [], []>} : vector<8x32xf32>, vector<32x2xf32>, vector<8x2xf32> -> vector<8x2xf32>
    %c1_127 = arith.constant 1 : index
    %c0_128 = arith.constant 0 : index
    %c0_129 = arith.constant 0 : index
    %202 = vector.load %arg11[%c1_127, %c0_128, %c0_129] : memref<2x8x2xf32, #tpu.memory_space<vmem>>, vector<1x8x2xf32>
    %203 = vector.shape_cast %202 : vector<1x8x2xf32> to vector<8x2xf32>
    %204 = vector.shape_cast %201 : vector<8x2xf32> to vector<1x8x2xf32>
    tpu.vector_store %arg11[%c1_127, %c0_128, %c0_129], %204 {strides = array<i32>} : memref<2x8x2xf32, #tpu.memory_space<vmem>>, vector<1x8x2xf32>,
    return
  }
  func.func @transform_0(%arg0: i32) -> (i32, i32, i32) {
    %c0_i32 = arith.constant 0 : i32
    %c0_i32_0 = arith.constant 0 : i32
    %c0_i32_1 = arith.constant 0 : i32
    %c0_i32_2 = arith.constant 0 : i32
    return %c0_i32, %c0_i32_0, %c0_i32_1 : i32, i32, i32
  }
  func.func @transform_1(%arg0: i32) -> (i32, i32) {
    %c0_i32 = arith.constant 0 : i32
    %c0_i32_0 = arith.constant 0 : i32
    %c0_i32_1 = arith.constant 0 : i32
    return %c0_i32, %c0_i32_0 : i32, i32
  }
  func.func @transform_2(%arg0: i32) -> (i32, i32) {
    %c0_i32 = arith.constant 0 : i32
    %c0_i32_0 = arith.constant 0 : i32
    %c0_i32_1 = arith.constant 0 : i32
    return %c0_i32, %c0_i32_0 : i32, i32
  }
  func.func @transform_3(%arg0: i32) -> (i32, i32) {
    %c0_i32 = arith.constant 0 : i32
    %c0_i32_0 = arith.constant 0 : i32
    %c0_i32_1 = arith.constant 0 : i32
    return %c0_i32, %c0_i32_0 : i32, i32
  }
  func.func @transform_4(%arg0: i32) -> (i32, i32) {
    %c0_i32 = arith.constant 0 : i32
    %c0_i32_0 = arith.constant 0 : i32
    %c0_i32_1 = arith.constant 0 : i32
    return %c0_i32, %c0_i32_0 : i32, i32
  }
  func.func @transform_5(%arg0: i32) -> (i32, i32) {
    %c0_i32 = arith.constant 0 : i32
    %c0_i32_0 = arith.constant 0 : i32
    %c0_i32_1 = arith.constant 0 : i32
    return %c0_i32, %c0_i32_0 : i32, i32
  }
  func.func @transform_6(%arg0: i32) -> (i32, i32) {
    %c0_i32 = arith.constant 0 : i32
    %c0_i32_0 = arith.constant 0 : i32
    %c0_i32_1 = arith.constant 0 : i32
    return %c0_i32, %c0_i32_0 : i32, i32
  }
  func.func @transform_7(%arg0: i32) -> (i32, i32) {
    %c0_i32 = arith.constant 0 : i32
    %c0_i32_0 = arith.constant 0 : i32
    %c0_i32_1 = arith.constant 0 : i32
    return %c0_i32, %c0_i32_0 : i32, i32
  }
  func.func @transform_8(%arg0: i32) -> (i32, i32, i32) {
    %c0_i32 = arith.constant 0 : i32
    %c0_i32_0 = arith.constant 0 : i32
    %c0_i32_1 = arith.constant 0 : i32
    %c0_i32_2 = arith.constant 0 : i32
    return %c0_i32, %c0_i32_0, %c0_i32_1 : i32, i32, i32
  }
  func.func @transform_9(%arg0: i32) -> (i32, i32, i32) {
    %c0_i32 = arith.constant 0 : i32
    %c0_i32_0 = arith.constant 0 : i32
    %c0_i32_1 = arith.constant 0 : i32
    %c0_i32_2 = arith.constant 0 : i32
    return %c0_i32, %c0_i32_0, %c0_i32_1 : i32, i32, i32
  }
  func.func @transform_10(%arg0: i32) -> (i32, i32, i32) {
    %c0_i32 = arith.constant 0 : i32
    %c0_i32_0 = arith.constant 0 : i32
    %c0_i32_1 = arith.constant 0 : i32
    %c0_i32_2 = arith.constant 0 : i32
    return %c0_i32, %c0_i32_0, %c0_i32_1 : i32, i32, i32
  }
}

</mosaic_0001>

<llo_original>
// kernel: tpu_custom_call.1
$region0: #{tpu_custom_call.1}
  #allocation0 [shape = 'u32[]', space=smem, size = 0x4, offset = 0x4, fixed_abs, tag = 'smem constant byte address 0x4 - core index']
  #allocation1 [shape = 'u32[72,128]{1,0:T(1,128)}', space=vmem, size = 0x9000, scoped, tag = 'internal scratch']
  #allocation2 [shape = 'f32[8,2,32]{2,1,0:T(2,128)}', space=vmem, size = 0x2000, scoped, tag = 'scratch operand']
  #allocation3 [shape = 'f32[8,2,32]{2,1,0:T(2,128)}', space=vmem, size = 0x2000, scoped, tag = 'scratch operand']
  #allocation4 [shape = 'f32[8,2,32]{2,1,0:T(2,128)}', space=vmem, size = 0x2000, scoped, tag = 'scratch operand']
  %s0 = inlined_call_operand.vmem [shape: f32[2,8,4], index: 0, kind: input, shape index: {}]
  %s1 = inlined_call_operand.vmem [shape: f32[8,32], index: 1, kind: input, shape index: {}]
  %s2 = inlined_call_operand.vmem [shape: f32[1,32], index: 2, kind: input, shape index: {}]
  %s3 = inlined_call_operand.vmem [shape: f32[2,32], index: 3, kind: input, shape index: {}]
  %s4 = inlined_call_operand.vmem [shape: f32[2,32], index: 4, kind: input, shape index: {}]
  %s5 = inlined_call_operand.vmem [shape: f32[4,32], index: 5, kind: input, shape index: {}]
  %s6 = inlined_call_operand.vmem [shape: f32[32,32], index: 6, kind: input, shape index: {}]
  %s7 = inlined_call_operand.vmem [shape: f32[32,2], index: 7, kind: input, shape index: {}]
  %s8 = inlined_call_operand.hbm [shape: f32[2,8,32], index: 8, kind: output, shape index: {0}]
  %s9 = inlined_call_operand.hbm [shape: f32[2,8,32], index: 9, kind: output, shape index: {1}]
  %s10 = inlined_call_operand.vmem [shape: f32[2,8,2], index: 10, kind: output, shape index: {2}]
  %11 = xla_tuple %s8, %s9, %s10
  %s12 = sld [smem:[#allocation0]]
  $region58: #{tpu_custom_call.1} parent=0
    _
  %s14 = ssub.s32 1, %s12
  %s15 = scalar_select 0, %s14, %s12
  $region1: #{tpu_custom_call.1} parent=0
    #allocation5 [shape = 'u8[8192]{0}', space=vmem, size = 0x2000, scoped, tag = 'output window, operand 0, single buffered']
    #allocation6 [shape = 's32[1]{0}', space=sflag, size = 0x4, scoped, tag = 'scoped memory for tpu_custom_call.1']
    #allocation7 [shape = 'u8[8192]{0}', space=vmem, size = 0x2000, scoped, tag = 'output window, operand 1, single buffered']
    #allocation8 [shape = 's32[1]{0}', space=sflag, size = 0x4, scoped, tag = 'scoped memory for tpu_custom_call.1']
    %16 = vsyncpa [#allocation6], 0
    %17 = vsyncpa [#allocation8], 0
    // Predicated region
    $region2: #{tpu_custom_call.1} parent=1 // pred_check
      _
    $region3: #{tpu_custom_call.1} parent=1 // pred_check_branch
      %19 = sbr.rel (0) target = $region5
    $region4: #{tpu_custom_call.1} parent=1 // pred_region
      _
    $region5: #{tpu_custom_call.1} parent=1 // pred_fallthru
      _
    // Predicated region
    $region6: #{tpu_custom_call.1} parent=1 // pred_check
      _
    $region7: #{tpu_custom_call.1} parent=1 // pred_check_branch
      %21 = sbr.rel (0) target = $region9
    $region8: #{tpu_custom_call.1} parent=1 // pred_region
      _
    $region9: #{tpu_custom_call.1} parent=1 // pred_fallthru
      _
    // Predicated region
    $region10: #{tpu_custom_call.1} parent=1 // pred_check
      _
    $region11: #{tpu_custom_call.1} parent=1 // pred_check_branch
      %23 = sbr.rel (0) target = $region13
    $region12: #{tpu_custom_call.1} parent=1 // pred_region
      _
    $region13: #{tpu_custom_call.1} parent=1 // pred_fallthru
      _
    // Predicated region
    $region14: #{tpu_custom_call.1} parent=1 // pred_check
      _
    $region15: #{tpu_custom_call.1} parent=1 // pred_check_branch
      %25 = sbr.rel (0) target = $region17
    $region16: #{tpu_custom_call.1} parent=1 // pred_region
      _
    $region17: #{tpu_custom_call.1} parent=1 // pred_fallthru
      _
    // Predicated region
    $region18: #{tpu_custom_call.1} parent=1 // pred_check
      _
    $region19: #{tpu_custom_call.1} parent=1 // pred_check_branch
      %27 = sbr.rel (0) target = $region21
    $region20: #{tpu_custom_call.1} parent=1 // pred_region
      _
    $region21: #{tpu_custom_call.1} parent=1 // pred_fallthru
      _
    // Predicated region
    $region22: #{tpu_custom_call.1} parent=1 // pred_check
      _
    $region23: #{tpu_custom_call.1} parent=1 // pred_check_branch
      %29 = sbr.rel (0) target = $region25
    $region24: #{tpu_custom_call.1} parent=1 // pred_region
      _
    $region25: #{tpu_custom_call.1} parent=1 // pred_fallthru
      _
    // Predicated region
    $region26: #{tpu_custom_call.1} parent=1 // pred_check
      _
    $region27: #{tpu_custom_call.1} parent=1 // pred_check_branch
      %31 = sbr.rel (0) target = $region29
    $region28: #{tpu_custom_call.1} parent=1 // pred_region
      _
    $region29: #{tpu_custom_call.1} parent=1 // pred_fallthru
      _
    // Predicated region
    $region30: #{tpu_custom_call.1} parent=1 // pred_check
      _
    $region31: #{tpu_custom_call.1} parent=1 // pred_check_branch
      %33 = sbr.rel (0) target = $region33
    $region32: #{tpu_custom_call.1} parent=1 // pred_region
      _
    $region33: #{tpu_custom_call.1} parent=1 // pred_fallthru
      _
    %v34 = vld [vmem:[%s5] sm:$0xf]
    %v35 = vld [vmem:[%s6] sm:$0xff]
    %v36 = vld [vmem:[%s6 + $0x8] sm:$0xff]
    %v37 = vld [vmem:[%s6 + $0x10] sm:$0xff]
    %v38 = vld [vmem:[%s6 + $0x18] sm:$0xff]
    %v39 = vld [vmem:[%s2] sm:$0x1]
    %v40 = vld [vmem:[%s1] sm:$0xff]
    %v41 = vmul.f32 %v40, 0.01
    %v43 = vperm.slane %v39, 0
    %v45 = vadd.f32 %v43, %v41
    %v46 = vld [vmem:[%s0] sm:$0xff]
    %vm47 = vcmask 31744
    %v49 = vsel %vm47, %v46, 0
    %vm51 = vcmask 1043456
    %v53 = vsel %vm51, %v34, 0
    %55 = vmatpush.msra.mxu0 0.0
    %56 = vmatpush.msra.mxu0 0.0
    %57 = vmatpush.msra.mxu0 0.0
    %58 = vmatpush.msra.mxu0 0.0
    %59 = vmatpush.msra.mxu0 0.0
    %60 = vmatpush.msra.mxu0 0.0
    %61 = vmatpush.msra.mxu0 0.0
    %62 = vmatpush.msra.mxu0 0.0
    %63 = vmatpush.msra.mxu0 0.0
    %64 = vmatpush.msra.mxu0 0.0
    %65 = vmatpush.msra.mxu0 0.0
    %66 = vmatpush.msra.mxu0 0.0
    %67 = vmatpush.msra.mxu0 0.0
    %68 = vmatpush.msra.mxu0 0.0
    %69 = vmatpush.msra.mxu0 0.0
    %70 = vmatpush.msra.mxu0 %v53
    %71 = vmatmul.f32.gmra.mxu0 %v49
    %v72 = vpop.f32.mrf.mxu0
    %v73 = vadd.f32 %v45, %v72
    %74 = vdwg.mxu0
    %v76 = vrot.slane %v73, 1
    %v77 = vrot.slane %v73, 2
    %v78 = vrot.slane %v73, 3
    %v79 = vrot.slane %v73, 4
    %v80 = vrot.slane %v73, 5
    %v81 = vrot.slane %v73, 6
    %v82 = vrot.slane %v73, 7
    %vm90 = vcmask 253952
    %91 = vst.msk [vmem:[#allocation2] sm:$0x1] %vm90, %v73
    %92 = vst.msk [vmem:[#allocation2 + $0x2] sm:$0x1] %vm90, %v76
    %93 = vst.msk [vmem:[#allocation2 + $0x4] sm:$0x1] %vm90, %v77
    %94 = vst.msk [vmem:[#allocation2 + $0x6] sm:$0x1] %vm90, %v78
    %95 = vst.msk [vmem:[#allocation2 + $0x8] sm:$0x1] %vm90, %v79
    %96 = vst.msk [vmem:[#allocation2 + $0xa] sm:$0x1] %vm90, %v80
    %97 = vst.msk [vmem:[#allocation2 + $0xc] sm:$0x1] %vm90, %v81
    %98 = vst.msk [vmem:[#allocation2 + $0xe] sm:$0x1] %vm90, %v82
    %s99 = scalar_lea.vmem %s0, 8
    %v100 = vld [vmem:[%s99] sm:$0xff]
    %v102 = vsel %vm47, %v100, 0
    %104 = vmatpush.msra.mxu0 0.0
    %105 = vmatpush.msra.mxu0 0.0
    %106 = vmatpush.msra.mxu0 0.0
    %107 = vmatpush.msra.mxu0 0.0
    %108 = vmatpush.msra.mxu0 0.0
    %109 = vmatpush.msra.mxu0 0.0
    %110 = vmatpush.msra.mxu0 0.0
    %111 = vmatpush.msra.mxu0 0.0
    %112 = vmatpush.msra.mxu0 0.0
    %113 = vmatpush.msra.mxu0 0.0
    %114 = vmatpush.msra.mxu0 0.0
    %115 = vmatpush.msra.mxu0 0.0
    %116 = vmatpush.msra.mxu0 0.0
    %117 = vmatpush.msra.mxu0 0.0
    %118 = vmatpush.msra.mxu0 0.0
    %119 = vmatpush.msra.mxu0 %v53
    %120 = vmatmul.f32.gmra.mxu0 %v102
    %v121 = vpop.f32.mrf.mxu0
    %v122 = vadd.f32 %v45, %v121
    %123 = vdwg.mxu0
    %v125 = vrot.slane %v122, 1
    %v126 = vrot.slane %v122, 2
    %v127 = vrot.slane %v122, 3
    %v128 = vrot.slane %v122, 4
    %v129 = vrot.slane %v122, 5
    %v130 = vrot.slane %v122, 6
    %v131 = vrot.slane %v122, 7
    %139 = vst.msk [vmem:[#allocation2 + $0x1] sm:$0x1] %vm90, %v122
    %140 = vst.msk [vmem:[#allocation2 + $0x3] sm:$0x1] %vm90, %v125
    %141 = vst.msk [vmem:[#allocation2 + $0x5] sm:$0x1] %vm90, %v126
    %142 = vst.msk [vmem:[#allocation2 + $0x7] sm:$0x1] %vm90, %v127
    %143 = vst.msk [vmem:[#allocation2 + $0x9] sm:$0x1] %vm90, %v128
    %144 = vst.msk [vmem:[#allocation2 + $0xb] sm:$0x1] %vm90, %v129
    %145 = vst.msk [vmem:[#allocation2 + $0xd] sm:$0x1] %vm90, %v130
    %146 = vst.msk [vmem:[#allocation2 + $0xf] sm:$0x1] %vm90, %v131
    %v147 = vld [vmem:[%s3] sm:$0x3]
    %v148 = vld [vmem:[%s4] sm:$0x3]
    %v149 = vld [vmem:[#allocation2] sm:$0x3]
    %vm150 = vcmask 261120
    %v152 = vsel %vm150, %v148, 0
    %154 = vmatpush.msra.mxu0 0.0
    %155 = vmatpush.msra.mxu0 0.0
    %156 = vmatpush.msra.mxu0 0.0
    %157 = vmatpush.msra.mxu0 0.0
    %158 = vmatpush.msra.mxu0 0.0
    %159 = vmatpush.msra.mxu0 0.0
    %160 = vmatpush.msra.mxu0 0.0
    %161 = vmatpush.msra.mxu0 0.0
    %162 = vmatpush.msra.mxu0 0.0
    %163 = vmatpush.msra.mxu0 0.0
    %164 = vmatpush.msra.mxu0 0.0
    %165 = vmatpush.msra.mxu0 0.0
    %166 = vmatpush.msra.mxu0 %v38
    %167 = vmatpush.msra.mxu0 %v37
    %168 = vmatpush.msra.mxu0 %v36
    %169 = vmatpush.msra.mxu0 %v35
    %170 = vmatmul.f32.gmra.mxu0 %v152
    %v171 = vpop.f32.mrf.mxu0
    %v172 = vadd.f32 0.0, %v171
    %173 = vdwg.mxu0
    %v174 = vadd.f32 %v149, %v172
    %v175 = vmul.f32 %v147, 0.9
    %v176 = vmul.f32 %v174, 0.1
    %v177 = vadd.f32 %v175, %v176
    %v178 = vtanh.pop %v177
    %vm179 = vcmask 254976
    %180 = vst.msk [vmem:[#allocation3] sm:$0x3] %vm179, %v177
    %181 = vst.msk [vmem:[#allocation4] sm:$0x3] %vm179, %v178
    %s182 = scalar_lea.vmem [#allocation2], 2
    %v183 = vld [vmem:[%s182] sm:$0x3]
    %v185 = vsel %vm150, %v178, 0
    %187 = vmatpush.msra.mxu0 0.0
    %188 = vmatpush.msra.mxu0 0.0
    %189 = vmatpush.msra.mxu0 0.0
    %190 = vmatpush.msra.mxu0 0.0
    %191 = vmatpush.msra.mxu0 0.0
    %192 = vmatpush.msra.mxu0 0.0
    %193 = vmatpush.msra.mxu0 0.0
    %194 = vmatpush.msra.mxu0 0.0
    %195 = vmatpush.msra.mxu0 0.0
    %196 = vmatpush.msra.mxu0 0.0
    %197 = vmatpush.msra.mxu0 0.0
    %198 = vmatpush.msra.mxu0 0.0
    %199 = vmatpush.msra.mxu0 %v38
    %200 = vmatpush.msra.mxu0 %v37
    %201 = vmatpush.msra.mxu0 %v36
    %202 = vmatpush.msra.mxu0 %v35
    %203 = vmatmul.f32.gmra.mxu0 %v185
    %v204 = vpop.f32.mrf.mxu0
    %v205 = vadd.f32 0.0, %v204
    %206 = vdwg.mxu0
    %v207 = vadd.f32 %v183, %v205
    %v208 = vmul.f32 %v177, 0.9
    %v209 = vmul.f32 %v207, 0.1
    %v210 = vadd.f32 %v208, %v209
    %v211 = vtanh.pop %v210
    %s212 = scalar_lea.vmem [#allocation3], 2
    %213 = vst.msk [vmem:[%s212] sm:$0x3] %vm179, %v210
    %s214 = scalar_lea.vmem [#allocation4], 2
    %215 = vst.msk [vmem:[%s214] sm:$0x3] %vm179, %v211
    %s216 = scalar_lea.vmem [#allocation2], 4
    %v217 = vld [vmem:[%s216] sm:$0x3]
    %v219 = vsel %vm150, %v211, 0
    %221 = vmatpush.msra.mxu0 0.0
    %222 = vmatpush.msra.mxu0 0.0
    %223 = vmatpush.msra.mxu0 0.0
    %224 = vmatpush.msra.mxu0 0.0
    %225 = vmatpush.msra.mxu0 0.0
    %226 = vmatpush.msra.mxu0 0.0
    %227 = vmatpush.msra.mxu0 0.0
    %228 = vmatpush.msra.mxu0 0.0
    %229 = vmatpush.msra.mxu0 0.0
    %230 = vmatpush.msra.mxu0 0.0
    %231 = vmatpush.msra.mxu0 0.0
    %232 = vmatpush.msra.mxu0 0.0
    %233 = vmatpush.msra.mxu0 %v38
    %234 = vmatpush.msra.mxu0 %v37
    %235 = vmatpush.msra.mxu0 %v36
    %236 = vmatpush.msra.mxu0 %v35
    %237 = vmatmul.f32.gmra.mxu0 %v219
    %v238 = vpop.f32.mrf.mxu0
    %v239 = vadd.f32 0.0, %v238
    %240 = vdwg.mxu0
    %v241 = vadd.f32 %v217, %v239
    %v242 = vmul.f32 %v210, 0.9
    %v243 = vmul.f32 %v241, 0.1
    %v244 = vadd.f32 %v242, %v243
    %v245 = vtanh.pop %v244
    %s246 = scalar_lea.vmem [#allocation3], 4
    %247 = vst.msk [vmem:[%s246] sm:$0x3] %vm179, %v244
    %s248 = scalar_lea.vmem [#allocation4], 4
    %249 = vst.msk [vmem:[%s248] sm:$0x3] %vm179, %v245
    %s250 = scalar_lea.vmem [#allocation2], 6
    %v251 = vld [vmem:[%s250] sm:$0x3]
    %v253 = vsel %vm150, %v245, 0
    %255 = vmatpush.msra.mxu0 0.0
    %256 = vmatpush.msra.mxu0 0.0
    %257 = vmatpush.msra.mxu0 0.0
    %258 = vmatpush.msra.mxu0 0.0
    %259 = vmatpush.msra.mxu0 0.0
    %260 = vmatpush.msra.mxu0 0.0
    %261 = vmatpush.msra.mxu0 0.0
    %262 = vmatpush.msra.mxu0 0.0
    %263 = vmatpush.msra.mxu0 0.0
    %264 = vmatpush.msra.mxu0 0.0
    %265 = vmatpush.msra.mxu0 0.0
    %266 = vmatpush.msra.mxu0 0.0
    %267 = vmatpush.msra.mxu0 %v38
    %268 = vmatpush.msra.mxu0 %v37
    %269 = vmatpush.msra.mxu0 %v36
    %270 = vmatpush.msra.mxu0 %v35
    %271 = vmatmul.f32.gmra.mxu0 %v253
    %v272 = vpop.f32.mrf.mxu0
    %v273 = vadd.f32 0.0, %v272
    %274 = vdwg.mxu0
    %v275 = vadd.f32 %v251, %v273
    %v276 = vmul.f32 %v244, 0.9
    %v277 = vmul.f32 %v275, 0.1
    %v278 = vadd.f32 %v276, %v277
    %v279 = vtanh.pop %v278
    %s280 = scalar_lea.vmem [#allocation3], 6
    %281 = vst.msk [vmem:[%s280] sm:$0x3] %vm179, %v278
    %s282 = scalar_lea.vmem [#allocation4], 6
    %283 = vst.msk [vmem:[%s282] sm:$0x3] %vm179, %v279
    %s284 = scalar_lea.vmem [#allocation2], 8
    %v285 = vld [vmem:[%s284] sm:$0x3]
    %v287 = vsel %vm150, %v279, 0
    %289 = vmatpush.msra.mxu0 0.0
    %290 = vmatpush.msra.mxu0 0.0
    %291 = vmatpush.msra.mxu0 0.0
    %292 = vmatpush.msra.mxu0 0.0
    %293 = vmatpush.msra.mxu0 0.0
    %294 = vmatpush.msra.mxu0 0.0
    %295 = vmatpush.msra.mxu0 0.0
    %296 = vmatpush.msra.mxu0 0.0
    %297 = vmatpush.msra.mxu0 0.0
    %298 = vmatpush.msra.mxu0 0.0
    %299 = vmatpush.msra.mxu0 0.0
    %300 = vmatpush.msra.mxu0 0.0
    %301 = vmatpush.msra.mxu0 %v38
    %302 = vmatpush.msra.mxu0 %v37
    %303 = vmatpush.msra.mxu0 %v36
    %304 = vmatpush.msra.mxu0 %v35
    %305 = vmatmul.f32.gmra.mxu0 %v287
    %v306 = vpop.f32.mrf.mxu0
    %v307 = vadd.f32 0.0, %v306
    %308 = vdwg.mxu0
    %v309 = vadd.f32 %v285, %v307
    %v310 = vmul.f32 %v278, 0.9
    %v311 = vmul.f32 %v309, 0.1
    %v312 = vadd.f32 %v310, %v311
    %v313 = vtanh.pop %v312
    %s314 = scalar_lea.vmem [#allocation3], 8
    %315 = vst.msk [vmem:[%s314] sm:$0x3] %vm179, %v312
    %s316 = scalar_lea.vmem [#allocation4], 8
    %317 = vst.msk [vmem:[%s316] sm:$0x3] %vm179, %v313
    %s318 = scalar_lea.vmem [#allocation2], 10
    %v319 = vld [vmem:[%s318] sm:$0x3]
    %v321 = vsel %vm150, %v313, 0
    %323 = vmatpush.msra.mxu0 0.0
    %324 = vmatpush.msra.mxu0 0.0
    %325 = vmatpush.msra.mxu0 0.0
    %326 = vmatpush.msra.mxu0 0.0
    %327 = vmatpush.msra.mxu0 0.0
    %328 = vmatpush.msra.mxu0 0.0
    %329 = vmatpush.msra.mxu0 0.0
    %330 = vmatpush.msra.mxu0 0.0
    %331 = vmatpush.msra.mxu0 0.0
    %332 = vmatpush.msra.mxu0 0.0
    %333 = vmatpush.msra.mxu0 0.0
    %334 = vmatpush.msra.mxu0 0.0
    %335 = vmatpush.msra.mxu0 %v38
    %336 = vmatpush.msra.mxu0 %v37
    %337 = vmatpush.msra.mxu0 %v36
    %338 = vmatpush.msra.mxu0 %v35
    %339 = vmatmul.f32.gmra.mxu0 %v321
    %v340 = vpop.f32.mrf.mxu0
    %v341 = vadd.f32 0.0, %v340
    %342 = vdwg.mxu0
    %v343 = vadd.f32 %v319, %v341
    %v344 = vmul.f32 %v312, 0.9
    %v345 = vmul.f32 %v343, 0.1
    %v346 = vadd.f32 %v344, %v345
    %v347 = vtanh.pop %v346
    %s348 = scalar_lea.vmem [#allocation3], 10
    %349 = vst.msk [vmem:[%s348] sm:$0x3] %vm179, %v346
    %s350 = scalar_lea.vmem [#allocation4], 10
    %351 = vst.msk [vmem:[%s350] sm:$0x3] %vm179, %v347
    %s352 = scalar_lea.vmem [#allocation2], 12
    %v353 = vld [vmem:[%s352] sm:$0x3]
    %v355 = vsel %vm150, %v347, 0
    %357 = vmatpush.msra.mxu0 0.0
    %358 = vmatpush.msra.mxu0 0.0
    %359 = vmatpush.msra.mxu0 0.0
    %360 = vmatpush.msra.mxu0 0.0
    %361 = vmatpush.msra.mxu0 0.0
    %362 = vmatpush.msra.mxu0 0.0
    %363 = vmatpush.msra.mxu0 0.0
    %364 = vmatpush.msra.mxu0 0.0
    %365 = vmatpush.msra.mxu0 0.0
    %366 = vmatpush.msra.mxu0 0.0
    %367 = vmatpush.msra.mxu0 0.0
    %368 = vmatpush.msra.mxu0 0.0
    %369 = vmatpush.msra.mxu0 %v38
    %370 = vmatpush.msra.mxu0 %v37
    %371 = vmatpush.msra.mxu0 %v36
    %372 = vmatpush.msra.mxu0 %v35
    %373 = vmatmul.f32.gmra.mxu0 %v355
    %v374 = vpop.f32.mrf.mxu0
    %v375 = vadd.f32 0.0, %v374
    %376 = vdwg.mxu0
    %v377 = vadd.f32 %v353, %v375
    %v378 = vmul.f32 %v346, 0.9
    %v379 = vmul.f32 %v377, 0.1
    %v380 = vadd.f32 %v378, %v379
    %v381 = vtanh.pop %v380
    %s382 = scalar_lea.vmem [#allocation3], 12
    %383 = vst.msk [vmem:[%s382] sm:$0x3] %vm179, %v380
    %s384 = scalar_lea.vmem [#allocation4], 12
    %385 = vst.msk [vmem:[%s384] sm:$0x3] %vm179, %v381
    %s386 = scalar_lea.vmem [#allocation2], 14
    %v387 = vld [vmem:[%s386] sm:$0x3]
    %v389 = vsel %vm150, %v381, 0
    %391 = vmatpush.msra.mxu0 0.0
    %392 = vmatpush.msra.mxu0 0.0
    %393 = vmatpush.msra.mxu0 0.0
    %394 = vmatpush.msra.mxu0 0.0
    %395 = vmatpush.msra.mxu0 0.0
    %396 = vmatpush.msra.mxu0 0.0
    %397 = vmatpush.msra.mxu0 0.0
    %398 = vmatpush.msra.mxu0 0.0
    %399 = vmatpush.msra.mxu0 0.0
    %400 = vmatpush.msra.mxu0 0.0
    %401 = vmatpush.msra.mxu0 0.0
    %402 = vmatpush.msra.mxu0 0.0
    %403 = vmatpush.msra.mxu0 %v38
    %404 = vmatpush.msra.mxu0 %v37
    %405 = vmatpush.msra.mxu0 %v36
    %406 = vmatpush.msra.mxu0 %v35
    %407 = vmatmul.f32.gmra.mxu0 %v389
    %v408 = vpop.f32.mrf.mxu0
    %v409 = vadd.f32 0.0, %v408
    %410 = vdwg.mxu0
    %v411 = vadd.f32 %v387, %v409
    %v412 = vmul.f32 %v380, 0.9
    %v413 = vmul.f32 %v411, 0.1
    %v414 = vadd.f32 %v412, %v413
    %v415 = vtanh.pop %v414
    %s416 = scalar_lea.vmem [#allocation3], 14
    %417 = vst.msk [vmem:[%s416] sm:$0x3] %vm179, %v414
    %s418 = scalar_lea.vmem [#allocation4], 14
    %419 = vst.msk [vmem:[%s418] sm:$0x3] %vm179, %v415
    %v420 = vld [vmem:[%s7] sm:$0xff]
    %v421 = vld [vmem:[%s7 + $0x8] sm:$0xff]
    %v422 = vld [vmem:[%s7 + $0x10] sm:$0xff]
    %v423 = vld [vmem:[%s7 + $0x18] sm:$0xff]
    %v424 = vld [vmem:[#allocation3] sm:$0x1]
    %v425 = vld [vmem:[#allocation3 + $0x2] sm:$0x1]
    %v426 = vld [vmem:[#allocation3 + $0x4] sm:$0x1]
    %v427 = vld [vmem:[#allocation3 + $0x6] sm:$0x1]
    %v428 = vld [vmem:[#allocation3 + $0x8] sm:$0x1]
    %v429 = vld [vmem:[#allocation3 + $0xa] sm:$0x1]
    %v430 = vld [vmem:[#allocation3 + $0xc] sm:$0x1]
    %v431 = vld [vmem:[#allocation3 + $0xe] sm:$0x1]
    %v432 = vld [vmem:[#allocation4] sm:$0x1]
    %v433 = vld [vmem:[#allocation4 + $0x2] sm:$0x1]
    %v434 = vld [vmem:[#allocation4 + $0x4] sm:$0x1]
    %v435 = vld [vmem:[#allocation4 + $0x6] sm:$0x1]
    %v436 = vld [vmem:[#allocation4 + $0x8] sm:$0x1]
    %v437 = vld [vmem:[#allocation4 + $0xa] sm:$0x1]
    %v438 = vld [vmem:[#allocation4 + $0xc] sm:$0x1]
    %v439 = vld [vmem:[#allocation4 + $0xe] sm:$0x1]
    %v448 = vrot.slane %v425, 7
    %vm449 = vcmask 1041409
    %v450 = vsel %vm449, %v448, %v424
    %v451 = vrot.slane %v426, 6
    %vm452 = vcmask 1042434
    %v453 = vsel %vm452, %v451, %v450
    %v454 = vrot.slane %v427, 5
    %vm455 = vcmask 1043459
    %v456 = vsel %vm455, %v454, %v453
    %v457 = vrot.slane %v428, 4
    %vm458 = vcmask 1044484
    %v459 = vsel %vm458, %v457, %v456
    %v460 = vrot.slane %v429, 3
    %vm461 = vcmask 1045509
    %v462 = vsel %vm461, %v460, %v459
    %v463 = vrot.slane %v430, 2
    %vm464 = vcmask 1046534
    %v465 = vsel %vm464, %v463, %v462
    %v466 = vrot.slane %v431, 1
    %vm467 = vcmask 1047559
    %v468 = vsel %vm467, %v466, %v465
    %470 = vst.msk [vmem:[#allocation5] sm:$0xff] %vm150, %v468
    %v479 = vrot.slane %v433, 7
    %v480 = vsel %vm449, %v479, %v432
    %v481 = vrot.slane %v434, 6
    %v482 = vsel %vm452, %v481, %v480
    %v483 = vrot.slane %v435, 5
    %v484 = vsel %vm455, %v483, %v482
    %v485 = vrot.slane %v436, 4
    %v486 = vsel %vm458, %v485, %v484
    %v487 = vrot.slane %v437, 3
    %v488 = vsel %vm461, %v487, %v486
    %v489 = vrot.slane %v438, 2
    %v490 = vsel %vm464, %v489, %v488
    %v491 = vrot.slane %v439, 1
    %v492 = vsel %vm467, %v491, %v490
    %494 = vst.msk [vmem:[#allocation7] sm:$0xff] %vm150, %v492
    %v495 = vsel %vm150, %v492, 0
    %497 = vmatpush.msra.mxu0 0.0
    %498 = vmatpush.msra.mxu0 0.0
    %499 = vmatpush.msra.mxu0 0.0
    %500 = vmatpush.msra.mxu0 0.0
    %501 = vmatpush.msra.mxu0 0.0
    %502 = vmatpush.msra.mxu0 0.0
    %503 = vmatpush.msra.mxu0 0.0
    %504 = vmatpush.msra.mxu0 0.0
    %505 = vmatpush.msra.mxu0 0.0
    %506 = vmatpush.msra.mxu0 0.0
    %507 = vmatpush.msra.mxu0 0.0
    %508 = vmatpush.msra.mxu0 0.0
    %509 = vmatpush.msra.mxu0 %v423
    %510 = vmatpush.msra.mxu0 %v422
    %511 = vmatpush.msra.mxu0 %v421
    %512 = vmatpush.msra.mxu0 %v420
    %513 = vmatmul.f32.gmra.mxu0 %v495
    %v514 = vpop.f32.mrf.mxu0
    %v515 = vadd.f32 0.0, %v514
    %516 = vdwg.mxu0
    %vm517 = vcmask 15360
    %518 = vst.msk [vmem:[%s10] sm:$0xff] %vm517, %v515
    %v519 = vld [vmem:[#allocation3 + $0x1] sm:$0x1]
    %v520 = vld [vmem:[#allocation3 + $0x3] sm:$0x1]
    %v521 = vld [vmem:[#allocation3 + $0x5] sm:$0x1]
    %v522 = vld [vmem:[#allocation3 + $0x7] sm:$0x1]
    %v523 = vld [vmem:[#allocation3 + $0x9] sm:$0x1]
    %v524 = vld [vmem:[#allocation3 + $0xb] sm:$0x1]
    %v525 = vld [vmem:[#allocation3 + $0xd] sm:$0x1]
    %v526 = vld [vmem:[#allocation3 + $0xf] sm:$0x1]
    %v527 = vld [vmem:[#allocation4 + $0x1] sm:$0x1]
    %v528 = vld [vmem:[#allocation4 + $0x3] sm:$0x1]
    %v529 = vld [vmem:[#allocation4 + $0x5] sm:$0x1]
    %v530 = vld [vmem:[#allocation4 + $0x7] sm:$0x1]
    %v531 = vld [vmem:[#allocation4 + $0x9] sm:$0x1]
    %v532 = vld [vmem:[#allocation4 + $0xb] sm:$0x1]
    %v533 = vld [vmem:[#allocation4 + $0xd] sm:$0x1]
    %v534 = vld [vmem:[#allocation4 + $0xf] sm:$0x1]
    %v543 = vrot.slane %v520, 7
    %v544 = vsel %vm449, %v543, %v519
    %v545 = vrot.slane %v521, 6
    %v546 = vsel %vm452, %v545, %v544
    %v547 = vrot.slane %v522, 5
    %v548 = vsel %vm455, %v547, %v546
    %v549 = vrot.slane %v523, 4
    %v550 = vsel %vm458, %v549, %v548
    %v551 = vrot.slane %v524, 3
    %v552 = vsel %vm461, %v551, %v550
    %v553 = vrot.slane %v525, 2
    %v554 = vsel %vm464, %v553, %v552
    %v555 = vrot.slane %v526, 1
    %v556 = vsel %vm467, %v555, %v554
    %s558 = scalar_lea.vmem [#allocation5], 8
    %559 = vst.msk [vmem:[%s558] sm:$0xff] %vm150, %v556
    %v568 = vrot.slane %v528, 7
    %v569 = vsel %vm449, %v568, %v527
    %v570 = vrot.slane %v529, 6
    %v571 = vsel %vm452, %v570, %v569
    %v572 = vrot.slane %v530, 5
    %v573 = vsel %vm455, %v572, %v571
    %v574 = vrot.slane %v531, 4
    %v575 = vsel %vm458, %v574, %v573
    %v576 = vrot.slane %v532, 3
    %v577 = vsel %vm461, %v576, %v575
    %v578 = vrot.slane %v533, 2
    %v579 = vsel %vm464, %v578, %v577
    %v580 = vrot.slane %v534, 1
    %v581 = vsel %vm467, %v580, %v579
    %s583 = scalar_lea.vmem [#allocation7], 8
    %584 = vst.msk [vmem:[%s583] sm:$0xff] %vm150, %v581
    %v585 = vsel %vm150, %v581, 0
    %587 = vmatpush.msra.mxu0 0.0
    %588 = vmatpush.msra.mxu0 0.0
    %589 = vmatpush.msra.mxu0 0.0
    %590 = vmatpush.msra.mxu0 0.0
    %591 = vmatpush.msra.mxu0 0.0
    %592 = vmatpush.msra.mxu0 0.0
    %593 = vmatpush.msra.mxu0 0.0
    %594 = vmatpush.msra.mxu0 0.0
    %595 = vmatpush.msra.mxu0 0.0
    %596 = vmatpush.msra.mxu0 0.0
    %597 = vmatpush.msra.mxu0 0.0
    %598 = vmatpush.msra.mxu0 0.0
    %599 = vmatpush.msra.mxu0 %v423
    %600 = vmatpush.msra.mxu0 %v422
    %601 = vmatpush.msra.mxu0 %v421
    %602 = vmatpush.msra.mxu0 %v420
    %603 = vmatmul.f32.gmra.mxu0 %v585
    %v604 = vpop.f32.mrf.mxu0
    %v605 = vadd.f32 0.0, %v604
    %606 = vdwg.mxu0
    %s607 = scalar_lea.vmem %s10, 8
    %608 = vst.msk [vmem:[%s607] sm:$0xff] %vm517, %v605
    // Predicated region
    $region34: #{tpu_custom_call.1} parent=1 // pred_check
      _
    $region35: #{tpu_custom_call.1} parent=1 // pred_check_branch
      %610 = sbr.rel (0) target = $region37
    $region36: #{tpu_custom_call.1} parent=1 // pred_region
      %612 = vsyncadd [#allocation6], 0
      %s613 = sshll.u32 [#allocation5], 4
      %s614 = int_to_ptr.vmem [resolvable:$true] %s613
      %s615 = sshll.u32 %s8, 4
      %s616 = int_to_ptr.hbm [resolvable:$true] %s615
      %621 = dma.vmem_to_hbm [thread:$0]  %s614, 256, %s616, [#allocation6], 128, 128, 8
    $region37: #{tpu_custom_call.1} parent=1 // pred_fallthru
      _
    // Predicated region
    $region38: #{tpu_custom_call.1} parent=1 // pred_check
      _
    $region39: #{tpu_custom_call.1} parent=1 // pred_check_branch
      %623 = sbr.rel (0) target = $region41
    $region40: #{tpu_custom_call.1} parent=1 // pred_region
      %625 = vsyncadd [#allocation8], 0
      %s626 = sshll.u32 [#allocation7], 4
      %s627 = int_to_ptr.vmem [resolvable:$true] %s626
      %s628 = sshll.u32 %s9, 4
      %s629 = int_to_ptr.hbm [resolvable:$true] %s628
      %634 = dma.vmem_to_hbm [thread:$0]  %s627, 256, %s629, [#allocation8], 128, 128, 8
    $region41: #{tpu_custom_call.1} parent=1 // pred_fallthru
      _
    // Predicated region
    $region42: #{tpu_custom_call.1} parent=1 // pred_check
      _
    $region43: #{tpu_custom_call.1} parent=1 // pred_check_branch
      %636 = sbr.rel (0) target = $region45
    $region44: #{tpu_custom_call.1} parent=1 // pred_region
      _
    $region45: #{tpu_custom_call.1} parent=1 // pred_fallthru
      _
    // Predicated region
    $region46: #{tpu_custom_call.1} parent=1 // pred_check
      _
    $region47: #{tpu_custom_call.1} parent=1 // pred_check_branch
      %638 = sbr.rel (0) target = $region49
    $region48: #{tpu_custom_call.1} parent=1 // pred_region
      %640 = dma.done [#allocation6], 256
    $region49: #{tpu_custom_call.1} parent=1 // pred_fallthru
      _
    // Predicated region
    $region50: #{tpu_custom_call.1} parent=1 // pred_check
      _
    $region51: #{tpu_custom_call.1} parent=1 // pred_check_branch
      %642 = sbr.rel (0) target = $region53
    $region52: #{tpu_custom_call.1} parent=1 // pred_region
      %644 = dma.done [#allocation8], 256
    $region53: #{tpu_custom_call.1} parent=1 // pred_fallthru
      _
    // Predicated region
    $region54: #{tpu_custom_call.1} parent=1 // pred_check
      _
    $region55: #{tpu_custom_call.1} parent=1 // pred_check_branch
      %646 = sbr.rel (0) target = $region57
    $region56: #{tpu_custom_call.1} parent=1 // pred_region
      _
    $region57: #{tpu_custom_call.1} parent=1 // pred_fallthru
      _
    %647 = vsyncpa [#allocation6], 1
    %648 = vsyncpa [#allocation8], 1

</llo_original>
